<compile_context>
chip_gen: v6e
topology: v6e:2x2x1
jax: 0.10.0
libtpu: 0.0.40
codegen_flags: <defaults>
</compile_context>

<pallas_src>
import math
import functools

import jax
import jax.numpy as jnp
from jax.experimental import pallas as pl
from jax.experimental.pallas import tpu as pltpu


# ---------------------------------------------------------------------------
# helpers
# ---------------------------------------------------------------------------

def _pick_row_tile(m, target=512):
    """Largest row tile <= target that divides m and is a multiple of 8 (else m)."""
    if m <= target:
        return m
    t = target - (target % 8)
    while t >= 8:
        if m % t == 0:
            return t
        t -= 8
    return m


# ---------------------------------------------------------------------------
# Fused Q/K/V projection kernel (one launch, row-tiled, 3 MXU matmuls per step)
# ---------------------------------------------------------------------------

def _qkv_proj_kernel(xq_ref, xk_ref, xv_ref, w_ref, b_ref,
                     oq_ref, ok_ref, ov_ref):
    # x*: (TM, D); w: (3, D, N); b: (3, 1, N); o*: (TM, N)
    oq_ref[...] = jnp.dot(xq_ref[...], w_ref[0],
                          preferred_element_type=jnp.float32) + b_ref[0]
    ok_ref[...] = jnp.dot(xk_ref[...], w_ref[1],
                          preferred_element_type=jnp.float32) + b_ref[1]
    ov_ref[...] = jnp.dot(xv_ref[...], w_ref[2],
                          preferred_element_type=jnp.float32) + b_ref[2]


def pallas_qkv_proj(xq, xk, xv, w_qkv, b_qkv):
    M, K = xq.shape
    _, _, N = w_qkv.shape
    tm = _pick_row_tile(M)
    x_spec = pl.BlockSpec((tm, K), lambda i: (i, 0))
    o_spec = pl.BlockSpec((tm, N), lambda i: (i, 0))
    return pl.pallas_call(
        _qkv_proj_kernel,
        grid=(M // tm,),
        in_specs=[x_spec, x_spec, x_spec,
                  pl.BlockSpec((3, K, N), lambda i: (0, 0, 0)),
                  pl.BlockSpec((3, 1, N), lambda i: (0, 0, 0))],
        out_specs=[o_spec, o_spec, o_spec],
        out_shape=[jax.ShapeDtypeStruct((M, N), jnp.float32)] * 3,
        compiler_params=pltpu.CompilerParams(
            dimension_semantics=("parallel",)),
    )(xq, xk, xv, w_qkv, b_qkv)


# ---------------------------------------------------------------------------
# Generic row-tiled linear (used for the output projection)
# ---------------------------------------------------------------------------

def _linear_kernel(x_ref, w_ref, b_ref, o_ref):
    o_ref[...] = jnp.dot(x_ref[...], w_ref[...],
                         preferred_element_type=jnp.float32) + b_ref[...]


def pallas_linear(x, w, b):
    M, K = x.shape
    K2, N = w.shape
    assert K == K2
    tm = _pick_row_tile(M)
    return pl.pallas_call(
        _linear_kernel,
        grid=(M // tm,),
        in_specs=[pl.BlockSpec((tm, K), lambda i: (i, 0)),
                  pl.BlockSpec((K, N), lambda i: (0, 0)),
                  pl.BlockSpec((1, N), lambda i: (0, 0))],
        out_specs=pl.BlockSpec((tm, N), lambda i: (i, 0)),
        out_shape=jax.ShapeDtypeStruct((M, N), jnp.float32),
        compiler_params=pltpu.CompilerParams(
            dimension_semantics=("parallel",)),
    )(x, w, b.reshape(1, N))


# ---------------------------------------------------------------------------
# Time-aware attention kernel (flash-style over KV tiles, lane-dense heads)
# ---------------------------------------------------------------------------

def _time_aware_attn_kernel(q_ref, k_ref, v_ref, posq_ref, posk_ref, wp_ref,
                            bp_ref, mask_ref, o_ref, m_sc, l_sc, acc_sc,
                            *, head_num, head_dim, scale):
    kv = pl.program_id(1)
    S = q_ref.shape[0]
    Tk = k_ref.shape[0]

    @pl.when(kv == 0)
    def _():
        m_sc[...] = jnp.full_like(m_sc, -1e30)
        l_sc[...] = jnp.zeros_like(l_sc)
        acc_sc[...] = jnp.zeros_like(acc_sc)

    # Positional scores for ALL heads with one MXU matmul over this KV tile:
    #   diff (S, Tk, D) -> (S*Tk, D) @ (D, H) -> (S, Tk, H)
    diff = jnp.abs(posq_ref[...][:, None, :] - posk_ref[...][None, :, :])
    p_all = jnp.dot(diff.reshape(S * Tk, -1), wp_ref[...],
                    preferred_element_type=jnp.float32).reshape(S, Tk, head_num)

    # Finite mask bias (computed once, avoids -inf -> NaN on fully masked rows).
    mask_bias = jnp.where(mask_ref[...] < 0.5, -1e30, 0.0)          # (1, Tk)

    q_all = q_ref[...] * scale        # fold 1/sqrt(D) into q once for all heads
    k_all = k_ref[...]
    v_all = v_ref[...]

    for h in range(head_num):         # small, static head count
        lo = h * head_dim
        hi = lo + head_dim
        q_h = q_all[:, lo:hi]                                        # (S, D)
        k_h = k_all[:, lo:hi]                                        # (Tk, D)
        v_h = v_all[:, lo:hi]                                        # (Tk, D)
        f = jax.lax.dot_general(q_h, k_h, (((1,), (1,)), ((), ())),
                                preferred_element_type=jnp.float32)  # (S, Tk)
        scores = f + p_all[:, :, h] + bp_ref[h] + mask_bias

        m_prev = m_sc[:, h:h + 1]                                    # (S, 1)
        m_new = jnp.maximum(m_prev, jnp.max(scores, axis=-1, keepdims=True))
        alpha = jnp.exp(m_prev - m_new)                              # (S, 1)
        e = jnp.exp(scores - m_new)                                  # (S, Tk)
        l_sc[:, h:h + 1] = alpha * l_sc[:, h:h + 1] + jnp.sum(e, axis=-1,
                                                              keepdims=True)
        acc_sc[:, lo:hi] = (alpha * acc_sc[:, lo:hi]
                            + jnp.dot(e, v_h, preferred_element_type=jnp.float32))
        m_sc[:, h:h + 1] = m_new

    @pl.when(kv == pl.num_programs(1) - 1)
    def _():
        inv_l = pl.reciprocal(l_sc[...], approx=True)                # (S, H)
        acc = acc_sc[...]                                            # (S, H*D)
        parts = [acc[:, h * head_dim:(h + 1) * head_dim] * inv_l[:, h:h + 1]
                 for h in range(head_num)]
        o_ref[...] = jnp.concatenate(parts, axis=-1)                 # one dense store


def pallas_time_aware_attention(q, k, v, pos, wp, bp, mask3, *, head_num,
                                kv_tile=256):
    # q/k/v: (B, S, H*D); pos: (B, S, D); wp: (D, H); bp: (H,); mask3: (B, 1, S)
    B, S, HD = q.shape
    D = HD // head_num
    tk = kv_tile if (S > kv_tile and S % kv_tile == 0) else S
    n_kv = S // tk

    kernel = functools.partial(_time_aware_attn_kernel, head_num=head_num,
                               head_dim=D, scale=1.0 / math.sqrt(D))
    return pl.pallas_call(
        kernel,
        grid=(B, n_kv),
        in_specs=[
            pl.BlockSpec((None, S, HD), lambda b, j: (b, 0, 0)),    # q (all queries)
            pl.BlockSpec((None, tk, HD), lambda b, j: (b, j, 0)),   # k tile
            pl.BlockSpec((None, tk, HD), lambda b, j: (b, j, 0)),   # v tile
            pl.BlockSpec((None, S, D), lambda b, j: (b, 0, 0)),     # pos (queries)
            pl.BlockSpec((None, tk, D), lambda b, j: (b, j, 0)),    # pos (keys)
            pl.BlockSpec((D, head_num), lambda b, j: (0, 0)),       # pos_layer weight
            pl.BlockSpec(memory_space=pltpu.MemorySpace.SMEM),      # pos_layer bias
            pl.BlockSpec((None, 1, tk), lambda b, j: (b, 0, j)),    # key mask tile
        ],
        out_specs=pl.BlockSpec((None, S, HD), lambda b, j: (b, 0, 0)),
        out_shape=jax.ShapeDtypeStruct((B, S, HD), jnp.float32),
        scratch_shapes=[
            pltpu.VMEM((S, head_num), jnp.float32),   # running max per head
            pltpu.VMEM((S, head_num), jnp.float32),   # running sum per head
            pltpu.VMEM((S, HD), jnp.float32),         # output accumulator
        ],
        compiler_params=pltpu.CompilerParams(
            dimension_semantics=("parallel", "arbitrary")),
    )(q, k, v, pos, pos, wp, bp, mask3)


# ---------------------------------------------------------------------------
# Module wrapper (glue reshapes only — no transposes)
# ---------------------------------------------------------------------------

def init_params(key, input_dim, head_num):
    D, H = input_dim, head_num
    ks = jax.random.split(key, 10)

    def lin(kw, kb, fan_in, fan_out):
        bound = 1.0 / math.sqrt(fan_in)
        w = jax.random.uniform(kw, (fan_in, fan_out), jnp.float32, -bound, bound)
        b = jax.random.uniform(kb, (fan_out,), jnp.float32, -bound, bound)
        return w, b

    wq, bq = lin(ks[0], ks[1], D, D * H)
    wk, bk = lin(ks[2], ks[3], D, D * H)
    wv, bv = lin(ks[4], ks[5], D, D * H)
    wp, bp = lin(ks[6], ks[7], D, H)            # stored (D, H) == PyTorch weight.T
    wo, bo = lin(ks[8], ks[9], D * H, D)
    return dict(head_num=H,
                wq=wq, bq=bq, wk=wk, bk=bk, wv=wv, bv=bv,
                w_qkv=jnp.stack([wq, wk, wv]),                   # (3, D, H*D)
                b_qkv=jnp.stack([bq, bk, bv]).reshape(3, 1, D * H),
                wp=wp, bp=bp, wo=wo, bo=bo)


def time_aware_mha_forward(params, query, key, value, pos, mask=None):
    B, S, D = query.shape
    H = params["head_num"]
    HD = H * D
    M = B * S

    qp, kp, vp = pallas_qkv_proj(query.reshape(M, D), key.reshape(M, D),
                                 value.reshape(M, D),
                                 params["w_qkv"], params["b_qkv"])
    q = qp.reshape(B, S, HD)        # lane-dense head layout, no transposes
    k = kp.reshape(B, S, HD)
    v = vp.reshape(B, S, HD)

    if mask is None:
        mask = jnp.ones((B, S), dtype=jnp.float32)
    mask3 = mask.reshape(B, 1, S).astype(jnp.float32)

    ctx = pallas_time_aware_attention(q, k, v, pos, params["wp"], params["bp"],
                                      mask3, head_num=H)          # (B, S, H*D)
    out = pallas_linear(ctx.reshape(M, HD), params["wo"], params["bo"])
    return out.reshape(B, S, D)


# ---------------------------------------------------------------------------
# Pure-JAX reference (for validation)
# ---------------------------------------------------------------------------

def reference_forward(params, query, key, value, pos, mask):
    B, S, D = query.shape
    H = params["head_num"]

    def lin(x, w, b):
        return jnp.dot(x, w) + b

    q = lin(query, params["wq"], params["bq"]).reshape(B, S, H, D).transpose(0, 2, 1, 3)
    k = lin(key,   params["wk"], params["bk"]).reshape(B, S, H, D).transpose(0, 2, 1, 3)
    v = lin(value, params["wv"], params["bv"]).reshape(B, S, H, D).transpose(0, 2, 1, 3)

    f = jnp.einsum('bhid,bhjd->bhij', q, k) / math.sqrt(D)
    diff = jnp.abs(pos[:, :, None, :] - pos[:, None, :, :])          # (B,S,S,D)
    p = jnp.einsum('bijd,dh->bhij', diff, params["wp"]) \
        + params["bp"][None, :, None, None]
    scores = f + p
    scores = jnp.where(mask[:, None, None, :] == 0, -jnp.inf, scores)
    attn = jax.nn.softmax(scores, axis=-1)
    out = jnp.einsum('bhij,bhjd->bhid', attn, v)
    out = out.transpose(0, 2, 1, 3).reshape(B, S, H * D)
    return lin(out, params["wo"], params["bo"])


# ---------------------------------------------------------------------------

if __name__ == "__main__":
    B, S, D, H = 2, 8, 32, 4           # batch, seq, input_dim, head_num
    root = jax.random.PRNGKey(0)
    k1, k2, k3, k4, kparams = jax.random.split(root, 5)

    query = jax.random.normal(k1, (B, S, D), dtype=jnp.float32)
    key_in = jax.random.normal(k2, (B, S, D), dtype=jnp.float32)
    value = jax.random.normal(k3, (B, S, D), dtype=jnp.float32)
    pos = jax.random.normal(k4, (B, S, D), dtype=jnp.float32)
    mask = jnp.ones((B, S), dtype=jnp.float32).at[1, -2:].set(0.0)

    params = init_params(kparams, D, H)

    out = time_aware_mha_forward(params, query, key_in, value, pos, mask)
    out = jax.block_until_ready(out)

    ref = reference_forward(params, query, key_in, value, pos, mask)
    err = float(jnp.max(jnp.abs(out - ref)))
    assert out.shape == (B, S, D), out.shape
    assert err < 3e-2, f"max abs diff vs reference too large: {err}"
    print("KERNEL_OK")
</pallas_src>

<mosaic_0001>
module attributes {stable_mosaic.version = 11 : i64} {
  func.func @_qkv_proj_kernel(%arg0: i32, %arg1: memref<16x32xf32, #tpu.memory_space<vmem>>, %arg2: memref<16x32xf32, #tpu.memory_space<vmem>>, %arg3: memref<16x32xf32, #tpu.memory_space<vmem>>, %arg4: memref<3x32x128xf32, #tpu.memory_space<vmem>>, %arg5: memref<3x1x128xf32, #tpu.memory_space<vmem>>, %arg6: memref<16x128xf32, #tpu.memory_space<vmem>>, %arg7: memref<16x128xf32, #tpu.memory_space<vmem>>, %arg8: memref<16x128xf32, #tpu.memory_space<vmem>>) attributes {dimension_semantics = [#tpu.dimension_semantics<parallel>], iteration_bounds = array<i64: 1>, scalar_prefetch = 0 : i64, scratch_operands = 0 : i64, tpu.core_type = #tpu.core_type<tc>, window_params = [{transform_indices = @transform_0, window_bounds = array<i64: 16, 32>}, {transform_indices = @transform_1, window_bounds = array<i64: 16, 32>}, {transform_indices = @transform_2, window_bounds = array<i64: 16, 32>}, {pipeline_mode = #tpu.pipeline_mode<synchronous>, transform_indices = @transform_3, window_bounds = array<i64: 3, 32, 128>}, {pipeline_mode = #tpu.pipeline_mode<synchronous>, transform_indices = @transform_4, window_bounds = array<i64: 3, 1, 128>}, {transform_indices = @transform_5, window_bounds = array<i64: 16, 128>}, {transform_indices = @transform_6, window_bounds = array<i64: 16, 128>}, {transform_indices = @transform_7, window_bounds = array<i64: 16, 128>}]} {
    %c0 = arith.constant 0 : index
    %c0_0 = arith.constant 0 : index
    %0 = vector.load %arg1[%c0, %c0_0] : memref<16x32xf32, #tpu.memory_space<vmem>>, vector<16x32xf32>
    %c0_1 = arith.constant 0 : index
    %c0_2 = arith.constant 0 : index
    %c0_3 = arith.constant 0 : index
    %1 = vector.load %arg4[%c0_1, %c0_2, %c0_3] : memref<3x32x128xf32, #tpu.memory_space<vmem>>, vector<1x32x128xf32>
    %2 = vector.shape_cast %1 : vector<1x32x128xf32> to vector<32x128xf32>
    %cst = arith.constant dense<0.000000e+00> : vector<16x128xf32>
    %3 = tpu.matmul %0, %2, %cst {dimension_numbers = #tpu.dot_dimension_numbers<[1], [0], [0], [1], [0, 0, 1, 1], [], []>} : vector<16x32xf32>, vector<32x128xf32>, vector<16x128xf32> -> vector<16x128xf32>
    %c0_4 = arith.constant 0 : index
    %c0_5 = arith.constant 0 : index
    %c0_6 = arith.constant 0 : index
    %4 = vector.load %arg5[%c0_4, %c0_5, %c0_6] : memref<3x1x128xf32, #tpu.memory_space<vmem>>, vector<1x1x128xf32>
    %5 = vector.shape_cast %4 : vector<1x1x128xf32> to vector<1x128xf32>
    %6 = vector.broadcast %5 : vector<1x128xf32> to vector<16x128xf32>
    %7 = arith.addf %3, %6 : vector<16x128xf32>
    %c0_7 = arith.constant 0 : index
    %c0_8 = arith.constant 0 : index
    %8 = vector.load %arg6[%c0_7, %c0_8] : memref<16x128xf32, #tpu.memory_space<vmem>>, vector<16x128xf32>
    tpu.vector_store %arg6[%c0_7, %c0_8], %7 {strides = array<i32>} : memref<16x128xf32, #tpu.memory_space<vmem>>, vector<16x128xf32>,
    %c0_9 = arith.constant 0 : index
    %c0_10 = arith.constant 0 : index
    %9 = vector.load %arg2[%c0_9, %c0_10] : memref<16x32xf32, #tpu.memory_space<vmem>>, vector<16x32xf32>
    %c1 = arith.constant 1 : index
    %c0_11 = arith.constant 0 : index
    %c0_12 = arith.constant 0 : index
    %10 = vector.load %arg4[%c1, %c0_11, %c0_12] : memref<3x32x128xf32, #tpu.memory_space<vmem>>, vector<1x32x128xf32>
    %11 = vector.shape_cast %10 : vector<1x32x128xf32> to vector<32x128xf32>
    %cst_13 = arith.constant dense<0.000000e+00> : vector<16x128xf32>
    %12 = tpu.matmul %9, %11, %cst_13 {dimension_numbers = #tpu.dot_dimension_numbers<[1], [0], [0], [1], [0, 0, 1, 1], [], []>} : vector<16x32xf32>, vector<32x128xf32>, vector<16x128xf32> -> vector<16x128xf32>
    %c1_14 = arith.constant 1 : index
    %c0_15 = arith.constant 0 : index
    %c0_16 = arith.constant 0 : index
    %13 = vector.load %arg5[%c1_14, %c0_15, %c0_16] : memref<3x1x128xf32, #tpu.memory_space<vmem>>, vector<1x1x128xf32>
    %14 = vector.shape_cast %13 : vector<1x1x128xf32> to vector<1x128xf32>
    %15 = vector.broadcast %14 : vector<1x128xf32> to vector<16x128xf32>
    %16 = arith.addf %12, %15 : vector<16x128xf32>
    %c0_17 = arith.constant 0 : index
    %c0_18 = arith.constant 0 : index
    %17 = vector.load %arg7[%c0_17, %c0_18] : memref<16x128xf32, #tpu.memory_space<vmem>>, vector<16x128xf32>
    tpu.vector_store %arg7[%c0_17, %c0_18], %16 {strides = array<i32>} : memref<16x128xf32, #tpu.memory_space<vmem>>, vector<16x128xf32>,
    %c0_19 = arith.constant 0 : index
    %c0_20 = arith.constant 0 : index
    %18 = vector.load %arg3[%c0_19, %c0_20] : memref<16x32xf32, #tpu.memory_space<vmem>>, vector<16x32xf32>
    %c2 = arith.constant 2 : index
    %c0_21 = arith.constant 0 : index
    %c0_22 = arith.constant 0 : index
    %19 = vector.load %arg4[%c2, %c0_21, %c0_22] : memref<3x32x128xf32, #tpu.memory_space<vmem>>, vector<1x32x128xf32>
    %20 = vector.shape_cast %19 : vector<1x32x128xf32> to vector<32x128xf32>
    %cst_23 = arith.constant dense<0.000000e+00> : vector<16x128xf32>
    %21 = tpu.matmul %18, %20, %cst_23 {dimension_numbers = #tpu.dot_dimension_numbers<[1], [0], [0], [1], [0, 0, 1, 1], [], []>} : vector<16x32xf32>, vector<32x128xf32>, vector<16x128xf32> -> vector<16x128xf32>
    %c2_24 = arith.constant 2 : index
    %c0_25 = arith.constant 0 : index
    %c0_26 = arith.constant 0 : index
    %22 = vector.load %arg5[%c2_24, %c0_25, %c0_26] : memref<3x1x128xf32, #tpu.memory_space<vmem>>, vector<1x1x128xf32>
    %23 = vector.shape_cast %22 : vector<1x1x128xf32> to vector<1x128xf32>
    %24 = vector.broadcast %23 : vector<1x128xf32> to vector<16x128xf32>
    %25 = arith.addf %21, %24 : vector<16x128xf32>
    %c0_27 = arith.constant 0 : index
    %c0_28 = arith.constant 0 : index
    %26 = vector.load %arg8[%c0_27, %c0_28] : memref<16x128xf32, #tpu.memory_space<vmem>>, vector<16x128xf32>
    tpu.vector_store %arg8[%c0_27, %c0_28], %25 {strides = array<i32>} : memref<16x128xf32, #tpu.memory_space<vmem>>, vector<16x128xf32>,
    return
  }
  func.func @transform_0(%arg0: i32) -> (i32, i32) {
    %c0_i32 = arith.constant 0 : i32
    %c0_i32_0 = arith.constant 0 : i32
    return %arg0, %c0_i32 : i32, i32
  }
  func.func @transform_1(%arg0: i32) -> (i32, i32) {
    %c0_i32 = arith.constant 0 : i32
    %c0_i32_0 = arith.constant 0 : i32
    return %arg0, %c0_i32 : i32, i32
  }
  func.func @transform_2(%arg0: i32) -> (i32, i32) {
    %c0_i32 = arith.constant 0 : i32
    %c0_i32_0 = arith.constant 0 : i32
    return %arg0, %c0_i32 : i32, i32
  }
  func.func @transform_3(%arg0: i32) -> (i32, i32, i32) {
    %c0_i32 = arith.constant 0 : i32
    %c0_i32_0 = arith.constant 0 : i32
    %c0_i32_1 = arith.constant 0 : i32
    %c0_i32_2 = arith.constant 0 : i32
    return %c0_i32, %c0_i32_0, %c0_i32_1 : i32, i32, i32
  }
  func.func @transform_4(%arg0: i32) -> (i32, i32, i32) {
    %c0_i32 = arith.constant 0 : i32
    %c0_i32_0 = arith.constant 0 : i32
    %c0_i32_1 = arith.constant 0 : i32
    %c0_i32_2 = arith.constant 0 : i32
    return %c0_i32, %c0_i32_0, %c0_i32_1 : i32, i32, i32
  }
  func.func @transform_5(%arg0: i32) -> (i32, i32) {
    %c0_i32 = arith.constant 0 : i32
    %c0_i32_0 = arith.constant 0 : i32
    return %arg0, %c0_i32 : i32, i32
  }
  func.func @transform_6(%arg0: i32) -> (i32, i32) {
    %c0_i32 = arith.constant 0 : i32
    %c0_i32_0 = arith.constant 0 : i32
    return %arg0, %c0_i32 : i32, i32
  }
  func.func @transform_7(%arg0: i32) -> (i32, i32) {
    %c0_i32 = arith.constant 0 : i32
    %c0_i32_0 = arith.constant 0 : i32
    return %arg0, %c0_i32 : i32, i32
  }
}

</mosaic_0001>

<llo_original>
// kernel: tpu_custom_call.1
$region0: #{tpu_custom_call.1}
  #allocation0 [shape = 'u32[]', space=smem, size = 0x4, offset = 0x4, fixed_abs, tag = 'smem constant byte address 0x4 - core index']
  #allocation1 [shape = 'u32[144,128]{1,0:T(1,128)}', space=vmem, size = 0x12000, scoped, tag = 'internal scratch']
  %s0 = inlined_call_operand.hbm [shape: f32[16,32], index: 0, kind: input, shape index: {}]
  %s1 = inlined_call_operand.hbm [shape: f32[16,32], index: 1, kind: input, shape index: {}]
  %s2 = inlined_call_operand.hbm [shape: f32[16,32], index: 2, kind: input, shape index: {}]
  %s3 = inlined_call_operand.hbm [shape: f32[3,32,128], index: 3, kind: input, shape index: {}]
  %s4 = inlined_call_operand.vmem [shape: f32[3,1,128], index: 4, kind: input, shape index: {}]
  %s5 = inlined_call_operand.hbm [shape: f32[16,128], index: 5, kind: output, shape index: {0}]
  %s6 = inlined_call_operand.hbm [shape: f32[16,128], index: 6, kind: output, shape index: {1}]
  %s7 = inlined_call_operand.hbm [shape: f32[16,128], index: 7, kind: output, shape index: {2}]
  %8 = xla_tuple %s5, %s6, %s7
  %s9 = sld [smem:[#allocation0]]
  $region62: #{tpu_custom_call.1} parent=0
    _
  %s11 = ssub.s32 1, %s9
  %s12 = scalar_select 0, %s11, %s9
  $region1: #{tpu_custom_call.1} parent=0
    #allocation2 [shape = 'u8[8192]{0}', space=vmem, size = 0x2000, scoped, tag = 'input window, operand 0, single buffered']
    #allocation3 [shape = 's32[1]{0}', space=sflag, size = 0x4, scoped, tag = 'scoped memory for tpu_custom_call.1']
    #allocation4 [shape = 's32[1]{0}', space=sflag, size = 0x4, scoped, tag = 'scoped memory for tpu_custom_call.1']
    #allocation5 [shape = 'u8[8192]{0}', space=vmem, size = 0x2000, scoped, tag = 'input window, operand 1, single buffered']
    #allocation6 [shape = 's32[1]{0}', space=sflag, size = 0x4, scoped, tag = 'scoped memory for tpu_custom_call.1']
    #allocation7 [shape = 'u8[8192]{0}', space=vmem, size = 0x2000, scoped, tag = 'input window, operand 2, single buffered']
    #allocation8 [shape = 'u8[49152]{0}', space=vmem, size = 0xc000, scoped, tag = 'input window, operand 3, single buffered']
    #allocation9 [shape = 's32[1]{0}', space=sflag, size = 0x4, scoped, tag = 'scoped memory for tpu_custom_call.1']
    #allocation10 [shape = 'u8[8192]{0}', space=vmem, size = 0x2000, scoped, tag = 'output window, operand 0, single buffered']
    #allocation11 [shape = 'u8[8192]{0}', space=vmem, size = 0x2000, scoped, tag = 'output window, operand 1, single buffered']
    #allocation12 [shape = 's32[1]{0}', space=sflag, size = 0x4, scoped, tag = 'scoped memory for tpu_custom_call.1']
    #allocation13 [shape = 'u8[8192]{0}', space=vmem, size = 0x2000, scoped, tag = 'output window, operand 2, single buffered']
    %13 = vsyncpa [#allocation3], 0
    %14 = vsyncpa [#allocation6], 0
    %15 = vsyncpa [#allocation9], 0
    %16 = vsyncpa [#allocation4], 0
    %17 = vsyncpa [#allocation12], 0
    // Predicated region
    $region2: #{tpu_custom_call.1} parent=1 // pred_check
      _
    $region3: #{tpu_custom_call.1} parent=1 // pred_check_branch
      %19 = sbr.rel (0) target = $region5
    $region4: #{tpu_custom_call.1} parent=1 // pred_region
      %s21 = ssub.s32 256, 256
      %22 = vsyncadd [#allocation3], %s21
      %s23 = sshll.u32 [#allocation2], 4
      %s24 = int_to_ptr.vmem [resolvable:$true] %s23
      %29 = dma.hbm_to_vmem [thread:$0]  %s0, 256, %s24, [#allocation3], 128, 128, 8
    $region5: #{tpu_custom_call.1} parent=1 // pred_fallthru
      _
    // Predicated region
    $region6: #{tpu_custom_call.1} parent=1 // pred_check
      _
    $region7: #{tpu_custom_call.1} parent=1 // pred_check_branch
      %31 = sbr.rel (0) target = $region9
    $region8: #{tpu_custom_call.1} parent=1 // pred_region
      %s33 = ssub.s32 256, 256
      %34 = vsyncadd [#allocation6], %s33
      %s35 = sshll.u32 [#allocation5], 4
      %s36 = int_to_ptr.vmem [resolvable:$true] %s35
      %41 = dma.hbm_to_vmem [thread:$0]  %s1, 256, %s36, [#allocation6], 128, 128, 8
    $region9: #{tpu_custom_call.1} parent=1 // pred_fallthru
      _
    // Predicated region
    $region10: #{tpu_custom_call.1} parent=1 // pred_check
      _
    $region11: #{tpu_custom_call.1} parent=1 // pred_check_branch
      %43 = sbr.rel (0) target = $region13
    $region12: #{tpu_custom_call.1} parent=1 // pred_region
      %s45 = ssub.s32 256, 256
      %46 = vsyncadd [#allocation6], %s45
      %s47 = sshll.u32 [#allocation7], 4
      %s48 = int_to_ptr.vmem [resolvable:$true] %s47
      %53 = dma.hbm_to_vmem [thread:$0]  %s2, 256, %s48, [#allocation6], 128, 128, 8
    $region13: #{tpu_custom_call.1} parent=1 // pred_fallthru
      _
    // Predicated region
    $region14: #{tpu_custom_call.1} parent=1 // pred_check
      _
    $region15: #{tpu_custom_call.1} parent=1 // pred_check_branch
      %55 = sbr.rel (0) target = $region17
    $region16: #{tpu_custom_call.1} parent=1 // pred_region
      %s57 = ssub.s32 1536, 1536
      %58 = vsyncadd [#allocation9], %s57
      %s59 = sshll.u32 [#allocation8], 4
      %s60 = int_to_ptr.vmem [resolvable:$true] %s59
      %65 = dma.hbm_to_vmem [thread:$0]  %s3, 1536, %s60, [#allocation9], 128, 128, 8
    $region17: #{tpu_custom_call.1} parent=1 // pred_fallthru
      _
    // Predicated region
    $region18: #{tpu_custom_call.1} parent=1 // pred_check
      _
    $region19: #{tpu_custom_call.1} parent=1 // pred_check_branch
      %67 = sbr.rel (0) target = $region21
    $region20: #{tpu_custom_call.1} parent=1 // pred_region
      _
    $region21: #{tpu_custom_call.1} parent=1 // pred_fallthru
      _
    // Predicated region
    $region22: #{tpu_custom_call.1} parent=1 // pred_check
      _
    $region23: #{tpu_custom_call.1} parent=1 // pred_check_branch
      %69 = sbr.rel (0) target = $region25
    $region24: #{tpu_custom_call.1} parent=1 // pred_region
      %70 = dma.done [#allocation3], 256
    $region25: #{tpu_custom_call.1} parent=1 // pred_fallthru
      _
    // Predicated region
    $region26: #{tpu_custom_call.1} parent=1 // pred_check
      _
    $region27: #{tpu_custom_call.1} parent=1 // pred_check_branch
      %72 = sbr.rel (0) target = $region29
    $region28: #{tpu_custom_call.1} parent=1 // pred_region
      %73 = dma.done [#allocation6], 256
    $region29: #{tpu_custom_call.1} parent=1 // pred_fallthru
      _
    // Predicated region
    $region30: #{tpu_custom_call.1} parent=1 // pred_check
      _
    $region31: #{tpu_custom_call.1} parent=1 // pred_check_branch
      %75 = sbr.rel (0) target = $region33
    $region32: #{tpu_custom_call.1} parent=1 // pred_region
      %76 = dma.done [#allocation6], 256
    $region33: #{tpu_custom_call.1} parent=1 // pred_fallthru
      _
    // Predicated region
    $region34: #{tpu_custom_call.1} parent=1 // pred_check
      _
    $region35: #{tpu_custom_call.1} parent=1 // pred_check_branch
      %78 = sbr.rel (0) target = $region37
    $region36: #{tpu_custom_call.1} parent=1 // pred_region
      %79 = dma.done [#allocation9], 1536
    $region37: #{tpu_custom_call.1} parent=1 // pred_fallthru
      _
    %v80 = vld [vmem:[#allocation2] sm:$0xff]
    %v81 = vld [vmem:[#allocation2 + $0x8] sm:$0xff]
    %v82 = vld [vmem:[#allocation8] sm:$0xff]
    %v83 = vld [vmem:[#allocation8 + $0x8] sm:$0xff]
    %v84 = vld [vmem:[#allocation8 + $0x10] sm:$0xff]
    %v85 = vld [vmem:[#allocation8 + $0x18] sm:$0xff]
    %v86 = vld [vmem:[%s4] sm:$0x1]
    %v88 = vlaneseq
    %v89 = vshrl.u32 %v88, 7
    %v90 = vsub.s32 0, %v89
    %v91 = vrot.slane %v86, %v90
    %vm93 = vcmask 261120
    %v95 = vsel %vm93, %v80, 0
    %v98 = vsel %vm93, %v81, 0
    %100 = vmatprep.subr.mxu0 0.0
    %101 = vmatpush1.msra.mxu0 0.0
    %102 = vmatprep.subr.mxu0 0.0
    %103 = vmatpush1.msra.mxu0 0.0
    %104 = vmatprep.subr.mxu0 0.0
    %105 = vmatpush1.msra.mxu0 0.0
    %106 = vmatprep.subr.mxu0 0.0
    %107 = vmatpush1.msra.mxu0 0.0
    %108 = vmatprep.subr.mxu0 0.0
    %109 = vmatpush1.msra.mxu0 0.0
    %110 = vmatprep.subr.mxu0 0.0
    %111 = vmatpush1.msra.mxu0 0.0
    %112 = vmatprep.subr.mxu0 0.0
    %113 = vmatpush1.msra.mxu0 0.0
    %114 = vmatprep.subr.mxu0 0.0
    %115 = vmatpush1.msra.mxu0 0.0
    %116 = vmatprep.subr.mxu0 0.0
    %117 = vmatpush1.msra.mxu0 0.0
    %118 = vmatprep.subr.mxu0 0.0
    %119 = vmatpush1.msra.mxu0 0.0
    %120 = vmatprep.subr.mxu0 0.0
    %121 = vmatpush1.msra.mxu0 0.0
    %122 = vmatprep.subr.mxu0 0.0
    %123 = vmatpush1.msra.mxu0 0.0
    %124 = vmatprep.subr.mxu0 0.0
    %125 = vmatpush1.msra.mxu0 %v85
    %126 = vmatprep.subr.mxu0 0.0
    %127 = vmatpush1.msra.mxu0 %v84
    %128 = vmatprep.subr.mxu0 0.0
    %129 = vmatpush1.msra.mxu0 %v83
    %130 = vmatprep.subr.mxu0 0.0
    %131 = vmatpush1.msra.mxu0 %v82
    %132 = vmatprep.subr.mxu0 0.0
    %133 = vmatpush2.msra.mxu0 0.0
    %134 = vmatprep.subr.mxu0 0.0
    %135 = vmatpush2.msra.mxu0 0.0
    %136 = vmatprep.subr.mxu0 0.0
    %137 = vmatpush2.msra.mxu0 0.0
    %138 = vmatprep.subr.mxu0 0.0
    %139 = vmatpush2.msra.mxu0 0.0
    %140 = vmatprep.subr.mxu0 0.0
    %141 = vmatpush2.msra.mxu0 0.0
    %142 = vmatprep.subr.mxu0 0.0
    %143 = vmatpush2.msra.mxu0 0.0
    %144 = vmatprep.subr.mxu0 0.0
    %145 = vmatpush2.msra.mxu0 0.0
    %146 = vmatprep.subr.mxu0 0.0
    %147 = vmatpush2.msra.mxu0 0.0
    %148 = vmatprep.subr.mxu0 0.0
    %149 = vmatpush2.msra.mxu0 0.0
    %150 = vmatprep.subr.mxu0 0.0
    %151 = vmatpush2.msra.mxu0 0.0
    %152 = vmatprep.subr.mxu0 0.0
    %153 = vmatpush2.msra.mxu0 0.0
    %154 = vmatprep.subr.mxu0 0.0
    %155 = vmatpush2.msra.mxu0 0.0
    %156 = vmatprep.subr.mxu0 0.0
    %157 = vmatpush2.msra.mxu0 0.0
    %158 = vmatprep.subr.mxu0 0.0
    %159 = vmatpush2.msra.mxu0 0.0
    %160 = vmatprep.subr.mxu0 0.0
    %161 = vmatpush2.msra.mxu0 0.0
    %162 = vmatprep.subr.mxu0 0.0
    %163 = vmatpush2.msra.mxu0 0.0
    %164 = vmatprep.mubr.f32.mxu0 0.0
    %165 = vmatmul.mubr.f32.gmra.mxu0 %v95
    %v166 = vpop.f32.mrf.mxu0
    %v167 = vadd.f32 %v91, %v166
    %v168 = vpop.f32.mrf.mxu0
    %169 = vmatprep.mubr.f32.mxu0 0.0
    %170 = vmatmul.mubr.f32.gmra.mxu0 %v98
    %v171 = vpop.f32.mrf.mxu0
    %v172 = vadd.f32 %v91, %v171
    %v173 = vpop.f32.mrf.mxu0
    %174 = vdwg.mxu0
    %175 = vst [vmem:[#allocation10] sm:$0xff] %v167
    %176 = vst [vmem:[#allocation10 + $0x8] sm:$0xff] %v172
    %v177 = vld [vmem:[#allocation5] sm:$0xff]
    %v178 = vld [vmem:[#allocation5 + $0x8] sm:$0xff]
    %s179 = scalar_lea.vmem [#allocation8], 32
    %v180 = vld [vmem:[%s179] sm:$0xff]
    %v181 = vld [vmem:[%s179 + $0x8] sm:$0xff]
    %v182 = vld [vmem:[%s179 + $0x10] sm:$0xff]
    %v183 = vld [vmem:[%s179 + $0x18] sm:$0xff]
    %s184 = scalar_lea.vmem %s4, 1
    %v185 = vld [vmem:[%s184] sm:$0x1]
    %v187 = vlaneseq
    %v188 = vshrl.u32 %v187, 7
    %v189 = vsub.s32 0, %v188
    %v190 = vrot.slane %v185, %v189
    %v193 = vsel %vm93, %v177, 0
    %v196 = vsel %vm93, %v178, 0
    %198 = vmatprep.subr.mxu0 0.0
    %199 = vmatpush1.msra.mxu0 0.0
    %200 = vmatprep.subr.mxu0 0.0
    %201 = vmatpush1.msra.mxu0 0.0
    %202 = vmatprep.subr.mxu0 0.0
    %203 = vmatpush1.msra.mxu0 0.0
    %204 = vmatprep.subr.mxu0 0.0
    %205 = vmatpush1.msra.mxu0 0.0
    %206 = vmatprep.subr.mxu0 0.0
    %207 = vmatpush1.msra.mxu0 0.0
    %208 = vmatprep.subr.mxu0 0.0
    %209 = vmatpush1.msra.mxu0 0.0
    %210 = vmatprep.subr.mxu0 0.0
    %211 = vmatpush1.msra.mxu0 0.0
    %212 = vmatprep.subr.mxu0 0.0
    %213 = vmatpush1.msra.mxu0 0.0
    %214 = vmatprep.subr.mxu0 0.0
    %215 = vmatpush1.msra.mxu0 0.0
    %216 = vmatprep.subr.mxu0 0.0
    %217 = vmatpush1.msra.mxu0 0.0
    %218 = vmatprep.subr.mxu0 0.0
    %219 = vmatpush1.msra.mxu0 0.0
    %220 = vmatprep.subr.mxu0 0.0
    %221 = vmatpush1.msra.mxu0 0.0
    %222 = vmatprep.subr.mxu0 0.0
    %223 = vmatpush1.msra.mxu0 %v183
    %224 = vmatprep.subr.mxu0 0.0
    %225 = vmatpush1.msra.mxu0 %v182
    %226 = vmatprep.subr.mxu0 0.0
    %227 = vmatpush1.msra.mxu0 %v181
    %228 = vmatprep.subr.mxu0 0.0
    %229 = vmatpush1.msra.mxu0 %v180
    %230 = vmatprep.subr.mxu0 0.0
    %231 = vmatpush2.msra.mxu0 0.0
    %232 = vmatprep.subr.mxu0 0.0
    %233 = vmatpush2.msra.mxu0 0.0
    %234 = vmatprep.subr.mxu0 0.0
    %235 = vmatpush2.msra.mxu0 0.0
    %236 = vmatprep.subr.mxu0 0.0
    %237 = vmatpush2.msra.mxu0 0.0
    %238 = vmatprep.subr.mxu0 0.0
    %239 = vmatpush2.msra.mxu0 0.0
    %240 = vmatprep.subr.mxu0 0.0
    %241 = vmatpush2.msra.mxu0 0.0
    %242 = vmatprep.subr.mxu0 0.0
    %243 = vmatpush2.msra.mxu0 0.0
    %244 = vmatprep.subr.mxu0 0.0
    %245 = vmatpush2.msra.mxu0 0.0
    %246 = vmatprep.subr.mxu0 0.0
    %247 = vmatpush2.msra.mxu0 0.0
    %248 = vmatprep.subr.mxu0 0.0
    %249 = vmatpush2.msra.mxu0 0.0
    %250 = vmatprep.subr.mxu0 0.0
    %251 = vmatpush2.msra.mxu0 0.0
    %252 = vmatprep.subr.mxu0 0.0
    %253 = vmatpush2.msra.mxu0 0.0
    %254 = vmatprep.subr.mxu0 0.0
    %255 = vmatpush2.msra.mxu0 0.0
    %256 = vmatprep.subr.mxu0 0.0
    %257 = vmatpush2.msra.mxu0 0.0
    %258 = vmatprep.subr.mxu0 0.0
    %259 = vmatpush2.msra.mxu0 0.0
    %260 = vmatprep.subr.mxu0 0.0
    %261 = vmatpush2.msra.mxu0 0.0
    %262 = vmatprep.mubr.f32.mxu0 0.0
    %263 = vmatmul.mubr.f32.gmra.mxu0 %v193
    %v264 = vpop.f32.mrf.mxu0
    %v265 = vadd.f32 %v190, %v264
    %v266 = vpop.f32.mrf.mxu0
    %267 = vmatprep.mubr.f32.mxu0 0.0
    %268 = vmatmul.mubr.f32.gmra.mxu0 %v196
    %v269 = vpop.f32.mrf.mxu0
    %v270 = vadd.f32 %v190, %v269
    %v271 = vpop.f32.mrf.mxu0
    %272 = vdwg.mxu0
    %273 = vst [vmem:[#allocation11] sm:$0xff] %v265
    %274 = vst [vmem:[#allocation11 + $0x8] sm:$0xff] %v270
    %v275 = vld [vmem:[#allocation7] sm:$0xff]
    %v276 = vld [vmem:[#allocation7 + $0x8] sm:$0xff]
    %s277 = scalar_lea.vmem [#allocation8], 64
    %v278 = vld [vmem:[%s277] sm:$0xff]
    %v279 = vld [vmem:[%s277 + $0x8] sm:$0xff]
    %v280 = vld [vmem:[%s277 + $0x10] sm:$0xff]
    %v281 = vld [vmem:[%s277 + $0x18] sm:$0xff]
    %s282 = scalar_lea.vmem %s4, 2
    %v283 = vld [vmem:[%s282] sm:$0x1]
    %v285 = vlaneseq
    %v286 = vshrl.u32 %v285, 7
    %v287 = vsub.s32 0, %v286
    %v288 = vrot.slane %v283, %v287
    %v291 = vsel %vm93, %v275, 0
    %v294 = vsel %vm93, %v276, 0
    %296 = vmatprep.subr.mxu0 0.0
    %297 = vmatpush1.msra.mxu0 0.0
    %298 = vmatprep.subr.mxu0 0.0
    %299 = vmatpush1.msra.mxu0 0.0
    %300 = vmatprep.subr.mxu0 0.0
    %301 = vmatpush1.msra.mxu0 0.0
    %302 = vmatprep.subr.mxu0 0.0
    %303 = vmatpush1.msra.mxu0 0.0
    %304 = vmatprep.subr.mxu0 0.0
    %305 = vmatpush1.msra.mxu0 0.0
    %306 = vmatprep.subr.mxu0 0.0
    %307 = vmatpush1.msra.mxu0 0.0
    %308 = vmatprep.subr.mxu0 0.0
    %309 = vmatpush1.msra.mxu0 0.0
    %310 = vmatprep.subr.mxu0 0.0
    %311 = vmatpush1.msra.mxu0 0.0
    %312 = vmatprep.subr.mxu0 0.0
    %313 = vmatpush1.msra.mxu0 0.0
    %314 = vmatprep.subr.mxu0 0.0
    %315 = vmatpush1.msra.mxu0 0.0
    %316 = vmatprep.subr.mxu0 0.0
    %317 = vmatpush1.msra.mxu0 0.0
    %318 = vmatprep.subr.mxu0 0.0
    %319 = vmatpush1.msra.mxu0 0.0
    %320 = vmatprep.subr.mxu0 0.0
    %321 = vmatpush1.msra.mxu0 %v281
    %322 = vmatprep.subr.mxu0 0.0
    %323 = vmatpush1.msra.mxu0 %v280
    %324 = vmatprep.subr.mxu0 0.0
    %325 = vmatpush1.msra.mxu0 %v279
    %326 = vmatprep.subr.mxu0 0.0
    %327 = vmatpush1.msra.mxu0 %v278
    %328 = vmatprep.subr.mxu0 0.0
    %329 = vmatpush2.msra.mxu0 0.0
    %330 = vmatprep.subr.mxu0 0.0
    %331 = vmatpush2.msra.mxu0 0.0
    %332 = vmatprep.subr.mxu0 0.0
    %333 = vmatpush2.msra.mxu0 0.0
    %334 = vmatprep.subr.mxu0 0.0
    %335 = vmatpush2.msra.mxu0 0.0
    %336 = vmatprep.subr.mxu0 0.0
    %337 = vmatpush2.msra.mxu0 0.0
    %338 = vmatprep.subr.mxu0 0.0
    %339 = vmatpush2.msra.mxu0 0.0
    %340 = vmatprep.subr.mxu0 0.0
    %341 = vmatpush2.msra.mxu0 0.0
    %342 = vmatprep.subr.mxu0 0.0
    %343 = vmatpush2.msra.mxu0 0.0
    %344 = vmatprep.subr.mxu0 0.0
    %345 = vmatpush2.msra.mxu0 0.0
    %346 = vmatprep.subr.mxu0 0.0
    %347 = vmatpush2.msra.mxu0 0.0
    %348 = vmatprep.subr.mxu0 0.0
    %349 = vmatpush2.msra.mxu0 0.0
    %350 = vmatprep.subr.mxu0 0.0
    %351 = vmatpush2.msra.mxu0 0.0
    %352 = vmatprep.subr.mxu0 0.0
    %353 = vmatpush2.msra.mxu0 0.0
    %354 = vmatprep.subr.mxu0 0.0
    %355 = vmatpush2.msra.mxu0 0.0
    %356 = vmatprep.subr.mxu0 0.0
    %357 = vmatpush2.msra.mxu0 0.0
    %358 = vmatprep.subr.mxu0 0.0
    %359 = vmatpush2.msra.mxu0 0.0
    %360 = vmatprep.mubr.f32.mxu0 0.0
    %361 = vmatmul.mubr.f32.gmra.mxu0 %v291
    %v362 = vpop.f32.mrf.mxu0
    %v363 = vadd.f32 %v288, %v362
    %v364 = vpop.f32.mrf.mxu0
    %365 = vmatprep.mubr.f32.mxu0 0.0
    %366 = vmatmul.mubr.f32.gmra.mxu0 %v294
    %v367 = vpop.f32.mrf.mxu0
    %v368 = vadd.f32 %v288, %v367
    %v369 = vpop.f32.mrf.mxu0
    %370 = vdwg.mxu0
    %371 = vst [vmem:[#allocation13] sm:$0xff] %v363
    %372 = vst [vmem:[#allocation13 + $0x8] sm:$0xff] %v368
    // Predicated region
    $region38: #{tpu_custom_call.1} parent=1 // pred_check
      _
    $region39: #{tpu_custom_call.1} parent=1 // pred_check_branch
      %374 = sbr.rel (0) target = $region41
    $region40: #{tpu_custom_call.1} parent=1 // pred_region
      %s376 = ssub.s32 256, 256
      %377 = vsyncadd [#allocation4], %s376
      %s378 = sshll.u32 [#allocation10], 4
      %s379 = int_to_ptr.vmem [resolvable:$true] %s378
      %384 = dma.vmem_to_hbm [thread:$0]  %s379, 256, %s5, [#allocation4], 128, 128, 8
    $region41: #{tpu_custom_call.1} parent=1 // pred_fallthru
      _
    // Predicated region
    $region42: #{tpu_custom_call.1} parent=1 // pred_check
      _
    $region43: #{tpu_custom_call.1} parent=1 // pred_check_branch
      %386 = sbr.rel (0) target = $region45
    $region44: #{tpu_custom_call.1} parent=1 // pred_region
      %s388 = ssub.s32 256, 256
      %389 = vsyncadd [#allocation12], %s388
      %s390 = sshll.u32 [#allocation11], 4
      %s391 = int_to_ptr.vmem [resolvable:$true] %s390
      %396 = dma.vmem_to_hbm [thread:$0]  %s391, 256, %s6, [#allocation12], 128, 128, 8
    $region45: #{tpu_custom_call.1} parent=1 // pred_fallthru
      _
    // Predicated region
    $region46: #{tpu_custom_call.1} parent=1 // pred_check
      _
    $region47: #{tpu_custom_call.1} parent=1 // pred_check_branch
      %398 = sbr.rel (0) target = $region49
    $region48: #{tpu_custom_call.1} parent=1 // pred_region
      %s400 = ssub.s32 256, 256
      %401 = vsyncadd [#allocation12], %s400
      %s402 = sshll.u32 [#allocation13], 4
      %s403 = int_to_ptr.vmem [resolvable:$true] %s402
      %408 = dma.vmem_to_hbm [thread:$0]  %s403, 256, %s7, [#allocation12], 128, 128, 8
    $region49: #{tpu_custom_call.1} parent=1 // pred_fallthru
      _
    // Predicated region
    $region50: #{tpu_custom_call.1} parent=1 // pred_check
      _
    $region51: #{tpu_custom_call.1} parent=1 // pred_check_branch
      %410 = sbr.rel (0) target = $region53
    $region52: #{tpu_custom_call.1} parent=1 // pred_region
      %411 = dma.done [#allocation4], 256
    $region53: #{tpu_custom_call.1} parent=1 // pred_fallthru
      _
    // Predicated region
    $region54: #{tpu_custom_call.1} parent=1 // pred_check
      _
    $region55: #{tpu_custom_call.1} parent=1 // pred_check_branch
      %413 = sbr.rel (0) target = $region57
    $region56: #{tpu_custom_call.1} parent=1 // pred_region
      %414 = dma.done [#allocation12], 256
    $region57: #{tpu_custom_call.1} parent=1 // pred_fallthru
      _
    // Predicated region
    $region58: #{tpu_custom_call.1} parent=1 // pred_check
      _
    $region59: #{tpu_custom_call.1} parent=1 // pred_check_branch
      %416 = sbr.rel (0) target = $region61
    $region60: #{tpu_custom_call.1} parent=1 // pred_region
      %417 = dma.done [#allocation12], 256
    $region61: #{tpu_custom_call.1} parent=1 // pred_fallthru
      _
    %418 = vsyncpa [#allocation3], 1
    %419 = vsyncpa [#allocation6], 1
    %420 = vsyncpa [#allocation9], 1
    %421 = vsyncpa [#allocation4], 1
    %422 = vsyncpa [#allocation12], 1

</llo_original>
